<compile_context>
chip_gen: v7x
topology: tpu7x:2x2x1
jax: 0.10.0
libtpu: 0.0.40
codegen_flags: <defaults>
</compile_context>

<pallas_src>
import functools

import jax
import jax.numpy as jnp
from jax import lax
from jax.experimental import pallas as pl
from jax.experimental.pallas import tpu as pltpu

_NEG_BIG = -1e30  # finite "minus infinity" (avoids inf-inf NaNs on padded tiles)


def _round_up(x, m):
    return (x + m - 1) // m * m


def _supcon_kernel(a_ref, b_ref, labr_ref, labc_ref, out_ref,
                   m_sc, s_sc, num_sc, cnt_sc,
                   *, inv_temp, loss_scale, n_valid):
    """One (row-tile, col-tile) step of the online masked log-sum-exp.

    a_ref   : [bm, D]  anchor rows (padded feature matrix)
    b_ref   : [bk, D]  contrast rows
    labr_ref: [bm, 1]  int32 labels of the anchor rows
    labc_ref: [1, bk]  int32 labels of the contrast rows
    out_ref : [bm, 1]  per-anchor-row loss (written on last col tile)
    scratch : running max / exp-sum / sum(mask*logits) / sum(mask), all [bm, 1] f32
    """
    i = pl.program_id(0)
    k = pl.program_id(1)

    @pl.when(k == 0)
    def _init():
        m_sc[...] = jnp.full_like(m_sc, _NEG_BIG)
        s_sc[...] = jnp.zeros_like(s_sc)
        num_sc[...] = jnp.zeros_like(num_sc)
        cnt_sc[...] = jnp.zeros_like(cnt_sc)

    # Fold 1/temperature into the small [bm, D] anchor tile (N*D muls, not N^2).
    mm_dtype = a_ref.dtype
    a = (a_ref[...].astype(jnp.float32) * inv_temp).astype(mm_dtype)
    b = b_ref[...]

    # MXU matmul with contracting dims (1, 1): no explicit transpose of b.
    logits = lax.dot_general(
        a, b,
        dimension_numbers=(((1,), (1,)), ((), ())),
        preferred_element_type=jnp.float32)            # [bm, bk] f32
    bm, bk = logits.shape

    # Per-tile index / validity masks (built in-kernel, never DMA'd).
    row_g = i * bm + lax.broadcasted_iota(jnp.int32, (bm, bk), 0)
    col_g = k * bk + lax.broadcasted_iota(jnp.int32, (bm, bk), 1)
    not_diag = row_g != col_g
    col_ok = col_g < n_valid                           # drop padded columns
    denom_keep = jnp.logical_and(not_diag, col_ok)

    # Positive-pair mask tile from labels (same class, not self, not padding).
    same_label = labr_ref[...] == labc_ref[...]        # (bm,1)==(1,bk) -> (bm,bk)
    pos_mask = jnp.logical_and(denom_keep, same_label).astype(jnp.float32)

    # Numerator pieces: sum_j mask*logits and sum_j mask (per anchor row).
    num_sc[...] += jnp.sum(pos_mask * logits, axis=1, keepdims=True)
    cnt_sc[...] += jnp.sum(pos_mask, axis=1, keepdims=True)

    # Online log-sum-exp over the denominator (diagonal + padding excluded).
    masked = jnp.where(denom_keep, logits, _NEG_BIG)
    tile_max = jnp.max(masked, axis=1, keepdims=True)
    m_new = jnp.maximum(m_sc[...], tile_max)
    s_sc[...] = s_sc[...] * jnp.exp(m_sc[...] - m_new) + jnp.sum(
        jnp.exp(masked - m_new), axis=1, keepdims=True)
    m_sc[...] = m_new

    @pl.when(k == pl.num_programs(1) - 1)
    def _finalize():
        lse = m_sc[...] + jnp.log(s_sc[...])
        # mean_j mask*(logits - lse) / sum_j mask  ==  num/cnt - lse
        # (exact reciprocal: the loss scalar is validated to 1e-4; rows with
        #  cnt == 0 give NaN exactly like the PyTorch 0/0 behavior.)
        mean_log_prob_pos = num_sc[...] * pl.reciprocal(cnt_sc[...]) - lse
        out_ref[...] = (-loss_scale) * mean_log_prob_pos


def supcon_loss(features, labels=None, mask=None,
                temperature=0.07, contrast_mode='all', base_temperature=0.07,
                block_m=256, block_k=256, matmul_dtype=None):
    """SupConLoss forward (matches mmaction SupConLoss.forward)."""
    if features.ndim < 3:
        raise ValueError('`features` needs to be [bsz, n_views, ...]')
    B, V = features.shape[0], features.shape[1]
    features = features.reshape(B, V, -1)
    D = features.shape[-1]

    if labels is not None and mask is not None:
        raise ValueError('Cannot define both `labels` and `mask`')
    if mask is not None:
        # TODO(synk): arbitrary user-provided bsz x bsz masks are not expressible
        # as label equality; that path is not implemented in the kernel.
        raise NotImplementedError('explicit `mask` argument not supported; use `labels`')
    if labels is None:
        labels = jnp.arange(B, dtype=jnp.int32)        # identity mask == SimCLR
    else:
        labels = jnp.asarray(labels).reshape(-1).astype(jnp.int32)
        if labels.shape[0] != B:
            raise ValueError('Num of labels does not match num of features')

    # contrast_feature = cat(unbind(features, dim=1), dim=0) -> [V*B, D], view-major.
    contrast = features.transpose(1, 0, 2).reshape(V * B, D)
    n_total = V * B
    if contrast_mode == 'all':
        anchor_n = n_total            # anchor rows = all rows
    elif contrast_mode == 'one':
        anchor_n = B                  # anchor rows = view-0 rows (a prefix)
    else:
        raise ValueError('Unknown mode: {}'.format(contrast_mode))

    labels_n = jnp.tile(labels, V)    # label of contrast row r == labels[r % B]

    # --- tiling / padding -------------------------------------------------
    block_m = min(block_m, _round_up(anchor_n, 8))
    block_k = min(block_k, _round_up(n_total, 128))
    a_pad = _round_up(anchor_n, block_m)
    n_pad = _round_up(n_total, block_k)
    p = max(a_pad, n_pad)

    if matmul_dtype is None:
        matmul_dtype = features.dtype  # bf16 recommended on v6e/v7x
    feat_p = jnp.zeros((p, D), matmul_dtype).at[:n_total].set(
        contrast.astype(matmul_dtype))
    lab_p = jnp.zeros((p,), jnp.int32).at[:n_total].set(labels_n)
    lab_row = lab_p.reshape(p, 1)
    lab_col = lab_p.reshape(1, p)

    grid = (a_pad // block_m, n_pad // block_k)

    kernel = functools.partial(
        _supcon_kernel,
        inv_temp=float(1.0 / temperature),
        loss_scale=float(temperature / base_temperature),
        n_valid=int(n_total),
    )

    per_row = pl.pallas_call(
        kernel,
        out_shape=jax.ShapeDtypeStruct((a_pad, 1), jnp.float32),
        grid_spec=pltpu.PrefetchScalarGridSpec(
            num_scalar_prefetch=0,
            grid=grid,
            in_specs=[
                pl.BlockSpec((block_m, D), lambda i, k: (i, 0)),   # anchor rows
                pl.BlockSpec((block_k, D), lambda i, k: (k, 0)),   # contrast rows
                pl.BlockSpec((block_m, 1), lambda i, k: (i, 0)),   # row labels
                pl.BlockSpec((1, block_k), lambda i, k: (0, k)),   # col labels
            ],
            out_specs=pl.BlockSpec((block_m, 1), lambda i, k: (i, 0)),
            scratch_shapes=[pltpu.VMEM((block_m, 1), jnp.float32)] * 4,
        ),
        compiler_params=pltpu.CompilerParams(
            dimension_semantics=("parallel", "arbitrary")),
    )(feat_p, feat_p, lab_row, lab_col)

    # loss.view(anchor_count, batch_size).mean() == mean over the anchor rows.
    return jnp.mean(per_row[:anchor_n, 0])


# ---------------------------------------------------------------------------
# Pure-JAX reference mirroring the PyTorch module exactly.
# ---------------------------------------------------------------------------
def _supcon_loss_ref(features, labels=None, temperature=0.07,
                     contrast_mode='all', base_temperature=0.07):
    B, V = features.shape[0], features.shape[1]
    features = features.reshape(B, V, -1).astype(jnp.float32)
    if labels is None:
        mask = jnp.eye(B, dtype=jnp.float32)
    else:
        labels = labels.reshape(-1, 1)
        mask = (labels == labels.T).astype(jnp.float32)
    contrast_count = V
    contrast_feature = jnp.concatenate([features[:, v] for v in range(V)], axis=0)
    if contrast_mode == 'one':
        anchor_feature = features[:, 0]
        anchor_count = 1
    else:
        anchor_feature = contrast_feature
        anchor_count = V
    adc = anchor_feature @ contrast_feature.T / temperature
    logits = adc - jnp.max(adc, axis=1, keepdims=True)
    mask = jnp.tile(mask, (anchor_count, contrast_count))
    n_anchor = anchor_count * B
    logits_mask = jnp.ones_like(mask).at[
        jnp.arange(n_anchor), jnp.arange(n_anchor)].set(0.0)
    mask = mask * logits_mask
    exp_logits = jnp.exp(logits) * logits_mask
    log_prob = logits - jnp.log(jnp.sum(exp_logits, axis=1, keepdims=True))
    mean_log_prob_pos = jnp.sum(mask * log_prob, axis=1) / jnp.sum(mask, axis=1)
    loss = -(temperature / base_temperature) * mean_log_prob_pos
    return jnp.mean(loss)


if __name__ == "__main__":
    key = jax.random.PRNGKey(0)
    k1, k2, k3 = jax.random.split(key, 3)

    # --- small case (module-style shapes) ---------------------------------
    B, V, D = 4, 2, 32
    feats = jax.random.normal(k1, (B, V, D), dtype=jnp.float32)
    feats = feats / jnp.linalg.norm(feats, axis=-1, keepdims=True)
    labels = jnp.array([0, 1, 0, 1], dtype=jnp.int32)

    loss_sup = supcon_loss(feats, labels=labels)
    jax.block_until_ready(loss_sup)
    ref_sup = _supcon_loss_ref(feats, labels=labels)
    assert jnp.allclose(loss_sup, ref_sup, atol=1e-4, rtol=1e-4), (loss_sup, ref_sup)

    loss_unsup = supcon_loss(feats)                       # SimCLR case
    ref_unsup = _supcon_loss_ref(feats, labels=None)
    assert jnp.allclose(loss_unsup, ref_unsup, atol=1e-4, rtol=1e-4), (loss_unsup, ref_unsup)

    loss_one = supcon_loss(feats, labels=labels, contrast_mode='one')
    ref_one = _supcon_loss_ref(feats, labels=labels, contrast_mode='one')
    assert jnp.allclose(loss_one, ref_one, atol=1e-4, rtol=1e-4), (loss_one, ref_one)

    # --- multi-tile case: exercises online LSE across column tiles, row
    #     parallel tiles and padded columns ---------------------------------
    B2, V2, D2 = 96, 2, 64
    feats2 = jax.random.normal(k2, (B2, V2, D2), dtype=jnp.float32)
    feats2 = feats2 / jnp.linalg.norm(feats2, axis=-1, keepdims=True)
    labels2 = jax.random.randint(k3, (B2,), 0, 8, dtype=jnp.int32)

    loss2 = supcon_loss(feats2, labels=labels2, block_m=64, block_k=128)
    jax.block_until_ready(loss2)
    ref2 = _supcon_loss_ref(feats2, labels=labels2)
    assert jnp.allclose(loss2, ref2, atol=1e-3, rtol=1e-3), (loss2, ref2)

    # --- bf16 matmul inputs (v6e/v7x MXU path), f32 accumulation ----------
    loss_bf16 = supcon_loss(feats2, labels=labels2, block_m=64, block_k=128,
                            matmul_dtype=jnp.bfloat16)
    jax.block_until_ready(loss_bf16)
    assert jnp.allclose(loss_bf16, ref2, atol=1e-1, rtol=1e-1), (loss_bf16, ref2)

    print("KERNEL_OK")
</pallas_src>

<mosaic_0001>
module attributes {stable_mosaic.version = 11 : i64} {
  func.func @_supcon_kernel(%arg0: i32, %arg1: i32, %arg2: memref<8x32xf32, #tpu.memory_space<vmem>>, %arg3: memref<128x32xf32, #tpu.memory_space<vmem>>, %arg4: memref<8x1xi32, #tpu.memory_space<vmem>>, %arg5: memref<1x128xi32, #tpu.memory_space<vmem>>, %arg6: memref<8x1xf32, #tpu.memory_space<vmem>>, %arg7: memref<8x1xf32, #tpu.memory_space<vmem>>, %arg8: memref<8x1xf32, #tpu.memory_space<vmem>>, %arg9: memref<8x1xf32, #tpu.memory_space<vmem>>, %arg10: memref<8x1xf32, #tpu.memory_space<vmem>>) attributes {dimension_semantics = [#tpu.dimension_semantics<parallel>, #tpu.dimension_semantics<arbitrary>], iteration_bounds = array<i64: 1, 1>, scalar_prefetch = 0 : i64, scratch_operands = 4 : i64, tpu.core_type = #tpu.core_type<tc>, window_params = [{transform_indices = @transform_0, window_bounds = array<i64: 8, 32>}, {transform_indices = @transform_1, window_bounds = array<i64: 128, 32>}, {transform_indices = @transform_2, window_bounds = array<i64: 8, 1>}, {transform_indices = @transform_3, window_bounds = array<i64: 1, 128>}, {transform_indices = @transform_4, window_bounds = array<i64: 8, 1>}]} {
    %c0_i32 = arith.constant 0 : i32
    %0 = arith.cmpi eq, %arg1, %c0_i32 : i32
    %1 = arith.extui %0 : i1 to i32
    %c0_i32_0 = arith.constant 0 : i32
    %2 = arith.cmpi ne, %1, %c0_i32_0 : i32
    scf.if %2 {
      %cst_35 = arith.constant -1.000000e+30 : f32
      %61 = vector.broadcast %cst_35 : f32 to vector<8x1xf32>
      %c0_36 = arith.constant 0 : index
      %c0_37 = arith.constant 0 : index
      %62 = vector.load %arg7[%c0_36, %c0_37] : memref<8x1xf32, #tpu.memory_space<vmem>>, vector<8x1xf32>
      tpu.vector_store %arg7[%c0_36, %c0_37], %61 {strides = array<i32>} : memref<8x1xf32, #tpu.memory_space<vmem>>, vector<8x1xf32>,
      %cst_38 = arith.constant 0.000000e+00 : f32
      %63 = vector.broadcast %cst_38 : f32 to vector<8x1xf32>
      %c0_39 = arith.constant 0 : index
      %c0_40 = arith.constant 0 : index
      %64 = vector.load %arg8[%c0_39, %c0_40] : memref<8x1xf32, #tpu.memory_space<vmem>>, vector<8x1xf32>
      tpu.vector_store %arg8[%c0_39, %c0_40], %63 {strides = array<i32>} : memref<8x1xf32, #tpu.memory_space<vmem>>, vector<8x1xf32>,
      %cst_41 = arith.constant 0.000000e+00 : f32
      %65 = vector.broadcast %cst_41 : f32 to vector<8x1xf32>
      %c0_42 = arith.constant 0 : index
      %c0_43 = arith.constant 0 : index
      %66 = vector.load %arg9[%c0_42, %c0_43] : memref<8x1xf32, #tpu.memory_space<vmem>>, vector<8x1xf32>
      tpu.vector_store %arg9[%c0_42, %c0_43], %65 {strides = array<i32>} : memref<8x1xf32, #tpu.memory_space<vmem>>, vector<8x1xf32>,
      %cst_44 = arith.constant 0.000000e+00 : f32
      %67 = vector.broadcast %cst_44 : f32 to vector<8x1xf32>
      %c0_45 = arith.constant 0 : index
      %c0_46 = arith.constant 0 : index
      %68 = vector.load %arg10[%c0_45, %c0_46] : memref<8x1xf32, #tpu.memory_space<vmem>>, vector<8x1xf32>
      tpu.vector_store %arg10[%c0_45, %c0_46], %67 {strides = array<i32>} : memref<8x1xf32, #tpu.memory_space<vmem>>, vector<8x1xf32>,
    } else {
    }
    %c0 = arith.constant 0 : index
    %c0_1 = arith.constant 0 : index
    %3 = vector.load %arg2[%c0, %c0_1] : memref<8x32xf32, #tpu.memory_space<vmem>>, vector<8x32xf32>
    %cst = arith.constant 14.2857141 : f32
    %4 = vector.broadcast %cst : f32 to vector<8x32xf32>
    %5 = arith.mulf %3, %4 : vector<8x32xf32>
    %c0_2 = arith.constant 0 : index
    %c0_3 = arith.constant 0 : index
    %6 = vector.load %arg3[%c0_2, %c0_3] : memref<128x32xf32, #tpu.memory_space<vmem>>, vector<128x32xf32>
    %cst_4 = arith.constant dense<0.000000e+00> : vector<8x128xf32>
    %7 = tpu.matmul %5, %6, %cst_4 {dimension_numbers = #tpu.dot_dimension_numbers<[1], [1], [0], [0], [0, 0, 1, 0], [], []>} : vector<8x32xf32>, vector<128x32xf32>, vector<8x128xf32> -> vector<8x128xf32>
    %c8_i32 = arith.constant 8 : i32
    %8 = arith.muli %arg0, %c8_i32 : i32
    %9 = tpu.iota {dimensions = array<i32: 0>} : vector<8x128xi32>
    %10 = vector.broadcast %8 : i32 to vector<8x128xi32>
    %11 = arith.addi %10, %9 : vector<8x128xi32>
    %c128_i32 = arith.constant 128 : i32
    %12 = arith.muli %arg1, %c128_i32 : i32
    %13 = tpu.iota {dimensions = array<i32: 1>} : vector<8x128xi32>
    %14 = vector.broadcast %12 : i32 to vector<8x128xi32>
    %15 = arith.addi %14, %13 : vector<8x128xi32>
    %16 = arith.cmpi ne, %11, %15 : vector<8x128xi32>
    %c8_i32_5 = arith.constant 8 : i32
    %17 = vector.broadcast %c8_i32_5 : i32 to vector<8x128xi32>
    %18 = arith.cmpi slt, %15, %17 : vector<8x128xi32>
    %19 = arith.andi %16, %18 : vector<8x128xi1>
    %c0_6 = arith.constant 0 : index
    %c0_7 = arith.constant 0 : index
    %20 = vector.load %arg4[%c0_6, %c0_7] : memref<8x1xi32, #tpu.memory_space<vmem>>, vector<8x1xi32>
    %c0_8 = arith.constant 0 : index
    %c0_9 = arith.constant 0 : index
    %21 = vector.load %arg5[%c0_8, %c0_9] : memref<1x128xi32, #tpu.memory_space<vmem>>, vector<1x128xi32>
    %22 = vector.broadcast %20 : vector<8x1xi32> to vector<8x128xi32>
    %23 = vector.broadcast %21 : vector<1x128xi32> to vector<8x128xi32>
    %24 = arith.cmpi eq, %22, %23 : vector<8x128xi32>
    %25 = arith.andi %19, %24 : vector<8x128xi1>
    %26 = arith.extui %25 : vector<8x128xi1> to vector<8x128xi32>
    %27 = arith.sitofp %26 : vector<8x128xi32> to vector<8x128xf32>
    %c0_10 = arith.constant 0 : index
    %c0_11 = arith.constant 0 : index
    %28 = vector.load %arg9[%c0_10, %c0_11] : memref<8x1xf32, #tpu.memory_space<vmem>>, vector<8x1xf32>
    %29 = arith.mulf %27, %7 : vector<8x128xf32>
    %cst_12 = arith.constant dense<0.000000e+00> : vector<8xf32>
    %30 = vector.multi_reduction <add>, %29, %cst_12 [1] : vector<8x128xf32> to vector<8xf32>
    %31 = vector.shape_cast %30 : vector<8xf32> to vector<8x1xf32>
    %32 = arith.addf %28, %31 : vector<8x1xf32>
    %c0_13 = arith.constant 0 : index
    %c0_14 = arith.constant 0 : index
    %33 = vector.load %arg9[%c0_13, %c0_14] : memref<8x1xf32, #tpu.memory_space<vmem>>, vector<8x1xf32>
    tpu.vector_store %arg9[%c0_13, %c0_14], %32 {strides = array<i32>} : memref<8x1xf32, #tpu.memory_space<vmem>>, vector<8x1xf32>,
    %c0_15 = arith.constant 0 : index
    %c0_16 = arith.constant 0 : index
    %34 = vector.load %arg10[%c0_15, %c0_16] : memref<8x1xf32, #tpu.memory_space<vmem>>, vector<8x1xf32>
    %cst_17 = arith.constant dense<0.000000e+00> : vector<8xf32>
    %35 = vector.multi_reduction <add>, %27, %cst_17 [1] : vector<8x128xf32> to vector<8xf32>
    %36 = vector.shape_cast %35 : vector<8xf32> to vector<8x1xf32>
    %37 = arith.addf %34, %36 : vector<8x1xf32>
    %c0_18 = arith.constant 0 : index
    %c0_19 = arith.constant 0 : index
    %38 = vector.load %arg10[%c0_18, %c0_19] : memref<8x1xf32, #tpu.memory_space<vmem>>, vector<8x1xf32>
    tpu.vector_store %arg10[%c0_18, %c0_19], %37 {strides = array<i32>} : memref<8x1xf32, #tpu.memory_space<vmem>>, vector<8x1xf32>,
    %cst_20 = arith.constant -1.000000e+30 : f32
    %39 = vector.broadcast %cst_20 : f32 to vector<8x128xf32>
    %40 = arith.select %19, %7, %39 : vector<8x128xi1>, vector<8x128xf32>
    %cst_21 = arith.constant dense<0xFF800000> : vector<8xf32>
    %41 = vector.multi_reduction <maximumf>, %40, %cst_21 [1] : vector<8x128xf32> to vector<8xf32>
    %42 = vector.shape_cast %41 : vector<8xf32> to vector<8x1xf32>
    %c0_22 = arith.constant 0 : index
    %c0_23 = arith.constant 0 : index
    %43 = vector.load %arg7[%c0_22, %c0_23] : memref<8x1xf32, #tpu.memory_space<vmem>>, vector<8x1xf32>
    %44 = arith.maximumf %43, %42 : vector<8x1xf32>
    %c0_24 = arith.constant 0 : index
    %c0_25 = arith.constant 0 : index
    %45 = vector.load %arg8[%c0_24, %c0_25] : memref<8x1xf32, #tpu.memory_space<vmem>>, vector<8x1xf32>
    %c0_26 = arith.constant 0 : index
    %c0_27 = arith.constant 0 : index
    %46 = vector.load %arg7[%c0_26, %c0_27] : memref<8x1xf32, #tpu.memory_space<vmem>>, vector<8x1xf32>
    %47 = arith.subf %46, %44 : vector<8x1xf32>
    %48 = math.exp %47 : vector<8x1xf32>
    %49 = arith.mulf %45, %48 : vector<8x1xf32>
    %50 = vector.broadcast %44 : vector<8x1xf32> to vector<8x128xf32>
    %51 = arith.subf %40, %50 : vector<8x128xf32>
    %52 = math.exp %51 : vector<8x128xf32>
    %cst_28 = arith.constant dense<0.000000e+00> : vector<8xf32>
    %53 = vector.multi_reduction <add>, %52, %cst_28 [1] : vector<8x128xf32> to vector<8xf32>
    %54 = vector.shape_cast %53 : vector<8xf32> to vector<8x1xf32>
    %55 = arith.addf %49, %54 : vector<8x1xf32>
    %c0_29 = arith.constant 0 : index
    %c0_30 = arith.constant 0 : index
    %56 = vector.load %arg8[%c0_29, %c0_30] : memref<8x1xf32, #tpu.memory_space<vmem>>, vector<8x1xf32>
    tpu.vector_store %arg8[%c0_29, %c0_30], %55 {strides = array<i32>} : memref<8x1xf32, #tpu.memory_space<vmem>>, vector<8x1xf32>,
    %c0_31 = arith.constant 0 : index
    %c0_32 = arith.constant 0 : index
    %57 = vector.load %arg7[%c0_31, %c0_32] : memref<8x1xf32, #tpu.memory_space<vmem>>, vector<8x1xf32>
    tpu.vector_store %arg7[%c0_31, %c0_32], %44 {strides = array<i32>} : memref<8x1xf32, #tpu.memory_space<vmem>>, vector<8x1xf32>,
    %c0_i32_33 = arith.constant 0 : i32
    %58 = arith.cmpi eq, %arg1, %c0_i32_33 : i32
    %59 = arith.extui %58 : i1 to i32
    %c0_i32_34 = arith.constant 0 : i32
    %60 = arith.cmpi ne, %59, %c0_i32_34 : i32
    scf.if %60 {
      %c0_35 = arith.constant 0 : index
      %c0_36 = arith.constant 0 : index
      %61 = vector.load %arg7[%c0_35, %c0_36] : memref<8x1xf32, #tpu.memory_space<vmem>>, vector<8x1xf32>
      %c0_37 = arith.constant 0 : index
      %c0_38 = arith.constant 0 : index
      %62 = vector.load %arg8[%c0_37, %c0_38] : memref<8x1xf32, #tpu.memory_space<vmem>>, vector<8x1xf32>
      %63 = math.log %62 : vector<8x1xf32>
      %64 = arith.addf %61, %63 : vector<8x1xf32>
      %c0_39 = arith.constant 0 : index
      %c0_40 = arith.constant 0 : index
      %65 = vector.load %arg9[%c0_39, %c0_40] : memref<8x1xf32, #tpu.memory_space<vmem>>, vector<8x1xf32>
      %c0_41 = arith.constant 0 : index
      %c0_42 = arith.constant 0 : index
      %66 = vector.load %arg10[%c0_41, %c0_42] : memref<8x1xf32, #tpu.memory_space<vmem>>, vector<8x1xf32>
      %67 = tpu.reciprocal %66 : vector<8x1xf32> -> vector<8x1xf32>
      %68 = arith.mulf %65, %67 : vector<8x1xf32>
      %69 = arith.subf %68, %64 : vector<8x1xf32>
      %cst_43 = arith.constant -1.000000e+00 : f32
      %70 = vector.broadcast %cst_43 : f32 to vector<8x1xf32>
      %71 = arith.mulf %70, %69 : vector<8x1xf32>
      %c0_44 = arith.constant 0 : index
      %c0_45 = arith.constant 0 : index
      %72 = vector.load %arg6[%c0_44, %c0_45] : memref<8x1xf32, #tpu.memory_space<vmem>>, vector<8x1xf32>
      tpu.vector_store %arg6[%c0_44, %c0_45], %71 {strides = array<i32>} : memref<8x1xf32, #tpu.memory_space<vmem>>, vector<8x1xf32>,
    } else {
    }
    return
  }
  func.func @transform_0(%arg0: i32, %arg1: i32) -> (i32, i32) {
    %c0_i32 = arith.constant 0 : i32
    %c0_i32_0 = arith.constant 0 : i32
    return %arg0, %c0_i32 : i32, i32
  }
  func.func @transform_1(%arg0: i32, %arg1: i32) -> (i32, i32) {
    %c0_i32 = arith.constant 0 : i32
    %c0_i32_0 = arith.constant 0 : i32
    return %arg1, %c0_i32 : i32, i32
  }
  func.func @transform_2(%arg0: i32, %arg1: i32) -> (i32, i32) {
    %c0_i32 = arith.constant 0 : i32
    %c0_i32_0 = arith.constant 0 : i32
    return %arg0, %c0_i32 : i32, i32
  }
  func.func @transform_3(%arg0: i32, %arg1: i32) -> (i32, i32) {
    %c0_i32 = arith.constant 0 : i32
    %c0_i32_0 = arith.constant 0 : i32
    return %c0_i32, %arg1 : i32, i32
  }
  func.func @transform_4(%arg0: i32, %arg1: i32) -> (i32, i32) {
    %c0_i32 = arith.constant 0 : i32
    %c0_i32_0 = arith.constant 0 : i32
    return %arg0, %c0_i32 : i32, i32
  }
}

</mosaic_0001>

<llo_original>
// kernel: tpu_custom_call.1
$region0: #{tpu_custom_call.1}
  #allocation0 [shape = 'u32[]', space=smem, size = 0x4, offset = 0x4, fixed_abs, tag = 'smem constant byte address 0x4 - core index']
  #allocation1 [shape = 'u32[144,128]{1,0:T(1,128)}', space=vmem, size = 0x12000, scoped, tag = 'internal scratch']
  #allocation2 [shape = 'f32[8,1]{1,0:T(8,128)}', space=vmem, size = 0x1000, scoped, tag = 'scratch operand']
  #allocation3 [shape = 'f32[8,1]{1,0:T(8,128)}', space=vmem, size = 0x1000, scoped, tag = 'scratch operand']
  #allocation4 [shape = 'f32[8,1]{1,0:T(8,128)}', space=vmem, size = 0x1000, scoped, tag = 'scratch operand']
  #allocation5 [shape = 'f32[8,1]{1,0:T(8,128)}', space=vmem, size = 0x1000, scoped, tag = 'scratch operand']
  %s0 = inlined_call_operand.vmem [shape: f32[128,32], index: 0, kind: input, shape index: {}]
  %s1 = inlined_call_operand.vmem [shape: f32[128,32], index: 1, kind: input, shape index: {}]
  %s2 = inlined_call_operand.vmem [shape: s32[128,1], index: 2, kind: input, shape index: {}]
  %s3 = inlined_call_operand.vmem [shape: s32[1,128], index: 3, kind: input, shape index: {}]
  %s4 = inlined_call_operand.vmem [shape: f32[8,1], index: 4, kind: output, shape index: {}]
  %s5 = sld [smem:[#allocation0]]
  $region34: #{tpu_custom_call.1} parent=0
    _
  %s7 = ssub.s32 1, %s5
  %s8 = scalar_select 0, %s7, %s5
  // Predicated region
  $region2: #{tpu_custom_call.1} parent=0 // pred_check
    _
  $region3: #{tpu_custom_call.1} parent=0 // pred_check_branch
    %10 = sbr.rel (0) target = $region5
  $region4: #{tpu_custom_call.1} parent=0 // pred_region
    _
  $region5: #{tpu_custom_call.1} parent=0 // pred_fallthru
    _
  // Predicated region
  $region6: #{tpu_custom_call.1} parent=0 // pred_check
    _
  $region7: #{tpu_custom_call.1} parent=0 // pred_check_branch
    %12 = sbr.rel (0) target = $region9
  $region8: #{tpu_custom_call.1} parent=0 // pred_region
    _
  $region9: #{tpu_custom_call.1} parent=0 // pred_fallthru
    _
  // Predicated region
  $region10: #{tpu_custom_call.1} parent=0 // pred_check
    _
  $region11: #{tpu_custom_call.1} parent=0 // pred_check_branch
    %14 = sbr.rel (0) target = $region13
  $region12: #{tpu_custom_call.1} parent=0 // pred_region
    _
  $region13: #{tpu_custom_call.1} parent=0 // pred_fallthru
    _
  // Predicated region
  $region14: #{tpu_custom_call.1} parent=0 // pred_check
    _
  $region15: #{tpu_custom_call.1} parent=0 // pred_check_branch
    %16 = sbr.rel (0) target = $region17
  $region16: #{tpu_custom_call.1} parent=0 // pred_region
    _
  $region17: #{tpu_custom_call.1} parent=0 // pred_fallthru
    _
  %p17 = scmp.eq.s32.totalorder 0, 0
  // Predicated region
  $region18: #{tpu_custom_call.1} parent=0 // pred_check
    %p18 = pneg %p17
  $region19: #{tpu_custom_call.1} parent=0 // pred_check_branch
    %20 = sbr.rel (%p18) target = $region21
  $region20: #{tpu_custom_call.1} parent=0 // pred_region
    %vm21 = vcmask 7168
    %22 = vst.msk [vmem:[#allocation2] sm:$0xff] %vm21, -1e+30
    %23 = vst.msk [vmem:[#allocation3] sm:$0xff] %vm21, 0.0
    %24 = vst.msk [vmem:[#allocation4] sm:$0xff] %vm21, 0.0
    %25 = vst.msk [vmem:[#allocation5] sm:$0xff] %vm21, 0.0
  $region21: #{tpu_custom_call.1} parent=0 // pred_fallthru
    _
  %v26 = vld [vmem:[%s0] sm:$0xff]
  %v27 = vmul.f32 %v26, 14.285714
  %v28 = vld [vmem:[%s1] sm:$0xff]
  %v29 = vld [vmem:[%s1 + $0x8] sm:$0xff]
  %v30 = vld [vmem:[%s1 + $0x10] sm:$0xff]
  %v31 = vld [vmem:[%s1 + $0x18] sm:$0xff]
  %v32 = vld [vmem:[%s1 + $0x20] sm:$0xff]
  %v33 = vld [vmem:[%s1 + $0x28] sm:$0xff]
  %v34 = vld [vmem:[%s1 + $0x30] sm:$0xff]
  %v35 = vld [vmem:[%s1 + $0x38] sm:$0xff]
  %v36 = vld [vmem:[%s1 + $0x40] sm:$0xff]
  %v37 = vld [vmem:[%s1 + $0x48] sm:$0xff]
  %v38 = vld [vmem:[%s1 + $0x50] sm:$0xff]
  %v39 = vld [vmem:[%s1 + $0x58] sm:$0xff]
  %v40 = vld [vmem:[%s1 + $0x60] sm:$0xff]
  %v41 = vld [vmem:[%s1 + $0x68] sm:$0xff]
  %v42 = vld [vmem:[%s1 + $0x70] sm:$0xff]
  %v43 = vld [vmem:[%s1 + $0x78] sm:$0xff]
  %vm44 = vcmask 261120
  %v46 = vsel %vm44, %v27, 0
  %v49 = vsel %vm44, %v28, 0
  %v52 = vsel %vm44, %v29, 0
  %v55 = vsel %vm44, %v30, 0
  %v58 = vsel %vm44, %v31, 0
  %v61 = vsel %vm44, %v32, 0
  %v64 = vsel %vm44, %v33, 0
  %v67 = vsel %vm44, %v34, 0
  %v70 = vsel %vm44, %v35, 0
  %v73 = vsel %vm44, %v36, 0
  %v76 = vsel %vm44, %v37, 0
  %v79 = vsel %vm44, %v38, 0
  %v82 = vsel %vm44, %v39, 0
  %v85 = vsel %vm44, %v40, 0
  %v88 = vsel %vm44, %v41, 0
  %v91 = vsel %vm44, %v42, 0
  %v94 = vsel %vm44, %v43, 0
  %96 = vmatprep.subr.mxu0 0.0
  %97 = vmatpush1.xpose.msra.mxu0 %v49
  %98 = vmatprep.subr.mxu0 0.0
  %99 = vmatpush1.xpose.msra.mxu0 %v52
  %100 = vmatprep.subr.mxu0 0.0
  %101 = vmatpush1.xpose.msra.mxu0 %v55
  %102 = vmatprep.subr.mxu0 0.0
  %103 = vmatpush1.xpose.msra.mxu0 %v58
  %104 = vmatprep.subr.mxu0 0.0
  %105 = vmatpush1.xpose.msra.mxu0 %v61
  %106 = vmatprep.subr.mxu0 0.0
  %107 = vmatpush1.xpose.msra.mxu0 %v64
  %108 = vmatprep.subr.mxu0 0.0
  %109 = vmatpush1.xpose.msra.mxu0 %v67
  %110 = vmatprep.subr.mxu0 0.0
  %111 = vmatpush1.xpose.msra.mxu0 %v70
  %112 = vmatprep.subr.mxu0 0.0
  %113 = vmatpush1.xpose.msra.mxu0 %v73
  %114 = vmatprep.subr.mxu0 0.0
  %115 = vmatpush1.xpose.msra.mxu0 %v76
  %116 = vmatprep.subr.mxu0 0.0
  %117 = vmatpush1.xpose.msra.mxu0 %v79
  %118 = vmatprep.subr.mxu0 0.0
  %119 = vmatpush1.xpose.msra.mxu0 %v82
  %120 = vmatprep.subr.mxu0 0.0
  %121 = vmatpush1.xpose.msra.mxu0 %v85
  %122 = vmatprep.subr.mxu0 0.0
  %123 = vmatpush1.xpose.msra.mxu0 %v88
  %124 = vmatprep.subr.mxu0 0.0
  %125 = vmatpush1.xpose.msra.mxu0 %v91
  %126 = vmatprep.subr.mxu0 0.0
  %127 = vmatpush1.xpose.msra.mxu0 %v94
  %128 = vmatprep.subr.mxu0 0.0
  %129 = vmatpush1.xpose.msra.mxu0 0.0
  %130 = vmatprep.subr.mxu0 0.0
  %131 = vmatpush1.xpose.msra.mxu0 0.0
  %132 = vmatprep.subr.mxu0 0.0
  %133 = vmatpush1.xpose.msra.mxu0 0.0
  %134 = vmatprep.subr.mxu0 0.0
  %135 = vmatpush1.xpose.msra.mxu0 0.0
  %136 = vmatprep.subr.mxu0 0.0
  %137 = vmatpush1.xpose.msra.mxu0 0.0
  %138 = vmatprep.subr.mxu0 0.0
  %139 = vmatpush1.xpose.msra.mxu0 0.0
  %140 = vmatprep.subr.mxu0 0.0
  %141 = vmatpush1.xpose.msra.mxu0 0.0
  %142 = vmatprep.subr.mxu0 0.0
  %143 = vmatpush1.xpose.msra.mxu0 0.0
  %144 = vmatprep.subr.mxu0 0.0
  %145 = vmatpush1.xpose.msra.mxu0 0.0
  %146 = vmatprep.subr.mxu0 0.0
  %147 = vmatpush1.xpose.msra.mxu0 0.0
  %148 = vmatprep.subr.mxu0 0.0
  %149 = vmatpush1.xpose.msra.mxu0 0.0
  %150 = vmatprep.subr.mxu0 0.0
  %151 = vmatpush1.xpose.msra.mxu0 0.0
  %152 = vmatprep.subr.mxu0 0.0
  %153 = vmatpush1.xpose.msra.mxu0 0.0
  %154 = vmatprep.subr.mxu0 0.0
  %155 = vmatpush1.xpose.msra.mxu0 0.0
  %156 = vmatprep.subr.mxu0 0.0
  %157 = vmatpush1.xpose.msra.mxu0 0.0
  %158 = vmatprep.subr.mxu0 0.0
  %159 = vmatpush1.xpose.msra.mxu0 0.0
  %160 = vmatprep.mubr.f32.mxu0 0.0
  %161 = vmatmul.mubr.f32.gmra.mrb[0].mxu0 %v46
  %v162 = vpop.f32.mrb[0].mxu0
  %v163 = vadd.f32 0.0, %v162
  %v164 = vpop.f32.mrb[0].mxu0
  %165 = vdwg.mxu0
  %s166 = smul.u32 0, 8
  %v167 = vlaneseq
  %v168 = vshrl.u32 %v167, 7
  %v169 = vstv %s166
  %v170 = vadd.s32 %v169, %v168
  %s171 = smul.u32 0, 128
  %v172 = vlaneseq
  %v173 = vand.u32 %v172, 127
  %v174 = vstv %s171
  %v175 = vadd.s32 %v174, %v173
  %vm176 = vcmp.ne.s32.totalorder %v170, %v175
  %vm177 = vcmp.lt.s32.totalorder %v175, 8
  %vm178 = vmand %vm176, %vm177
  %v179 = vld [vmem:[%s2] sm:$0xff]
  %v180 = vld [vmem:[%s3] sm:$0x1]
  %181 = vset.pattern.permute.xlu0 0
  %182 = vperm.xlu0 %181, %v179
  %v183 = vpop.permute.xlu0 %182
  %v184 = vlaneseq
  %v185 = vshrl.u32 %v184, 7
  %v186 = vsub.s32 0, %v185
  %v187 = vrot.slane %v180, %v186
  %vm188 = vcmp.eq.s32.totalorder %v183, %v187
  %vm189 = vmand %vm178, %vm188
  %v190 = vsel %vm189, 1, 0
  %v191 = vcvt.s32.f32 %v190
  %v192 = vld [vmem:[#allocation4] sm:$0xff]
  %v193 = vmul.f32 %v191, %v163
  %194 = vadd.xlane.f32.xlu0 %v193
  %v195 = vpop.xlane.xlu0 %194
  %v196 = vadd.f32 %v192, %v195
  %vm197 = vcmask 7168
  %198 = vst.msk [vmem:[#allocation4] sm:$0xff] %vm197, %v196
  %v199 = vld [vmem:[#allocation5] sm:$0xff]
  %200 = vadd.xlane.f32.xlu0 %v191
  %v201 = vpop.xlane.xlu0 %200
  %v202 = vadd.f32 %v199, %v201
  %203 = vst.msk [vmem:[#allocation5] sm:$0xff] %vm197, %v202
  %v204 = vsel %vm178, %v163, -1e+30
  %205 = vmax.xlane.f32.xlu0 %v204
  %v206 = vpop.xlane.xlu0 %205
  %v207 = vld [vmem:[#allocation2] sm:$0xff]
  %v208 = vmax.f32 %v207, %v206
  %v209 = vld [vmem:[#allocation3] sm:$0xff]
  %v210 = vsub.f32 %v207, %v208
  %v211 = vmul.f32 %v210, 1.442695
  %v212 = vpow.pop %v211
  %v213 = vmul.f32 %v209, %v212
  %215 = vset.pattern.permute.xlu0 0
  %216 = vperm.xlu0 %215, %v208
  %v217 = vpop.permute.xlu0 %216
  %v219 = vsub.f32 %v204, %v217
  %v220 = vmul.f32 %v219, 1.442695
  %v221 = vpow.pop %v220
  %222 = vadd.xlane.f32.xlu0 %v221
  %v223 = vpop.xlane.xlu0 %222
  %v224 = vadd.f32 %v213, %v223
  %225 = vst.msk [vmem:[#allocation3] sm:$0xff] %vm197, %v224
  %226 = vst.msk [vmem:[#allocation2] sm:$0xff] %vm197, %v208
  // Predicated region
  $region22: #{tpu_custom_call.1} parent=0 // pred_check
    %p227 = pneg %p17
  $region23: #{tpu_custom_call.1} parent=0 // pred_check_branch
    %229 = sbr.rel (%p227) target = $region25
  $region24: #{tpu_custom_call.1} parent=0 // pred_region
    %v230 = vld [vmem:[#allocation2] sm:$0xff]
    %v231 = vld [vmem:[#allocation3] sm:$0xff]
    %v232 = vlog2.pop %v231
    %v233 = vmul.f32 %v232, 0.6931472
    %v234 = vadd.f32 %v230, %v233
    %v235 = vld [vmem:[#allocation4] sm:$0xff]
    %v236 = vld [vmem:[#allocation5] sm:$0xff]
    %v237 = vrcp.pop %v236
    %v238 = vmul.f32 %v235, %v237
    %v239 = vsub.f32 %v238, %v234
    %v240 = vmul.f32 %v239, -1.0
    %241 = vst.msk [vmem:[%s4] sm:$0xff] %vm197, %v240
  $region25: #{tpu_custom_call.1} parent=0 // pred_fallthru
    _
  // Predicated region
  $region26: #{tpu_custom_call.1} parent=0 // pred_check
    _
  $region27: #{tpu_custom_call.1} parent=0 // pred_check_branch
    %243 = sbr.rel (0) target = $region29
  $region28: #{tpu_custom_call.1} parent=0 // pred_region
    _
  $region29: #{tpu_custom_call.1} parent=0 // pred_fallthru
    _
  // Predicated region
  $region30: #{tpu_custom_call.1} parent=0 // pred_check
    _
  $region31: #{tpu_custom_call.1} parent=0 // pred_check_branch
    %245 = sbr.rel (0) target = $region33
  $region32: #{tpu_custom_call.1} parent=0 // pred_region
    _
  $region33: #{tpu_custom_call.1} parent=0 // pred_fallthru
    _

</llo_original>
